<compile_context>
chip_gen: v7x
topology: tpu7x:2x2x1
jax: 0.10.0
libtpu: 0.0.40
codegen_flags: <defaults>
</compile_context>

<pallas_src>
import functools

import jax
import jax.numpy as jnp
from jax.experimental import pallas as pl
from jax.experimental.pallas import tpu as pltpu


# ----------------------------------------------------------------------------
# Fused Bottleneck kernel (one image per grid step), transposed layout
# ----------------------------------------------------------------------------
def _bottleneck_kernel(x_ref, s1_ref, b1_ref, w1_ref, s2_ref, b2_ref, w2_ref,
                       ml_ref, mr_ref, out_ref, hbuf, *, H, W, PAD):
    # x_ref  : VMEM (1, Cin, HW)       f32   one image, H*W on lanes
    # s1/b1  : VMEM (Cin, 1)           f32   folded BN1 scale / shift
    # w1_ref : VMEM (Cmid, Cin)        bf16  1x1 conv weight (torch w1[:, :, 0, 0])
    # s2/b2  : VMEM (Cmid, 1)          f32   folded BN2 scale / shift
    # w2_ref : VMEM (3, G, 3*Cmid)     bf16  3x3 conv weight, [ky, g, kx*Cmid + c]
    # ml/mr  : VMEM (1, HW)            bf16  horizontal boundary masks (x!=0 / x!=W-1)
    # out_ref: VMEM (1, G+Cin, HW)     f32   [conv2_out ; x]  (fused concat)
    # hbuf   : VMEM (3*Cmid, 2*PAD+HW) bf16  conv2 input, 3 horizontal shifts stacked
    Cin = x_ref.shape[1]
    Cmid = w1_ref.shape[0]
    G = w2_ref.shape[1]
    HW = H * W
    L = hbuf.shape[1]

    x = x_ref[0]                                              # (Cin, HW) f32

    # ---- BN1 (folded running stats) + ReLU, single cast to bf16 ------------
    h1 = jnp.maximum(x * s1_ref[...] + b1_ref[...], 0.0).astype(jnp.bfloat16)

    # ---- conv1 1x1: one MXU matmul, lane-dense (Cmid, HW) f32 result -------
    mid = jnp.dot(w1_ref[...], h1, preferred_element_type=jnp.float32)

    # ---- BN2 (folded) + ReLU in f32, ONE cast to bf16 -----------------------
    midb = jnp.maximum(mid * s2_ref[...] + b2_ref[...], 0.0).astype(jnp.bfloat16)

    # ---- Build the conv2 input scratch --------------------------------------
    # hbuf[j*Cmid + c, PAD + y*W + x] = mid[c, y, x + j - 1]  (0 outside width)
    # Lanes [PAD - W, PAD) and [PAD + HW, PAD + HW + W) act as the zero
    # vertical halo (padding=1).  Halo zeroing uses 128-aligned stores only;
    # the tail zero briefly covers part of the interior, which the aligned
    # interior stores below then overwrite.
    t0 = ((PAD + HW) // 128) * 128
    hbuf[:, 0:PAD] = jnp.zeros((3 * Cmid, PAD), jnp.bfloat16)
    hbuf[:, t0:L] = jnp.zeros((3 * Cmid, L - t0), jnp.bfloat16)

    # center copy (kx = 1): aligned store at lane offset PAD
    hbuf[Cmid:2 * Cmid, PAD:PAD + HW] = midb
    # left copy (kx = 0): value at x-1; the -1 lane offset wraps across image
    # rows, so mask out output column x == 0.
    hbuf[0:Cmid, PAD:PAD + HW] = (
        hbuf[Cmid:2 * Cmid, PAD - 1:PAD - 1 + HW] * ml_ref[...])
    # right copy (kx = 2): value at x+1; mask out output column x == W-1.
    hbuf[2 * Cmid:3 * Cmid, PAD:PAD + HW] = (
        hbuf[Cmid:2 * Cmid, PAD + 1:PAD + 1 + HW] * mr_ref[...])

    # ---- conv2 3x3, padding=1: THREE matmuls with K = 3*Cmid each -----------
    # Vertical tap ky is a contiguous lane-offset slice (offset (ky-1)*W).
    acc = jnp.zeros((G, HW), jnp.float32)
    for ky in range(3):                               # static -> unrolled
        start = PAD + (ky - 1) * W
        acc = acc + jnp.dot(w2_ref[ky], hbuf[:, start:start + HW],
                            preferred_element_type=jnp.float32)

    # ---- fused channel concat: [conv2_out ; x] along sublanes ---------------
    out_ref[0:1, 0:G, :] = acc[None].astype(out_ref.dtype)
    out_ref[0:1, G:G + Cin, :] = x_ref[...]


# ----------------------------------------------------------------------------
# Wrapper: Bottleneck.forward  (NCHW in, NCHW out, no transposes / no concat)
# ----------------------------------------------------------------------------
@jax.jit
def bottleneck_forward(x_nchw, params):
    """x_nchw: (N, Cin, H, W) f32.
    params = (s1, b1, w1t, s2, b2, w2g):
      s1, b1 : (Cin, 1)        folded BN1 scale / shift
      w1t    : (Cmid, Cin)     == torch conv1.weight[:, :, 0, 0]
      s2, b2 : (Cmid, 1)       folded BN2 scale / shift
      w2g    : (3, G, 3*Cmid)  w2g[ky, g, kx*Cmid + c] == torch conv2.weight[g, c, ky, kx]
    Returns (N, G + Cin, H, W): concat([conv2_out, x], channel).
    """
    s1, b1, w1t, s2, b2, w2g = params
    N, Cin, H, W = x_nchw.shape
    Cmid = w1t.shape[0]
    G = w2g.shape[1]
    HW = H * W
    PAD = ((W + 127) // 128) * 128        # halo region width (128-aligned, >= W)

    # Free contiguous reshape: channels stay leading, spatial flattens to lanes.
    x_flat = x_nchw.reshape(N, Cin, HW)

    # Horizontal boundary masks (constant-folded by XLA at trace time).
    col = jnp.arange(HW, dtype=jnp.int32) % W
    mask_l = (col != 0).astype(jnp.bfloat16).reshape(1, HW)
    mask_r = (col != W - 1).astype(jnp.bfloat16).reshape(1, HW)

    cost = pl.CostEstimate(
        flops=2 * N * HW * Cmid * (Cin + 9 * G),
        transcendentals=0,
        bytes_accessed=(x_flat.size + N * (G + Cin) * HW) * 4
                       + (w1t.size + w2g.size) * 2
                       + (s1.size + b1.size + s2.size + b2.size) * 4)

    kernel = functools.partial(_bottleneck_kernel, H=H, W=W, PAD=PAD)

    out_flat = pl.pallas_call(
        kernel,
        out_shape=jax.ShapeDtypeStruct((N, G + Cin, HW), jnp.float32),
        grid_spec=pltpu.PrefetchScalarGridSpec(
            num_scalar_prefetch=0,
            grid=(N,),
            in_specs=[
                pl.BlockSpec((1, Cin, HW), lambda n: (n, 0, 0)),
                pl.BlockSpec((Cin, 1), lambda n: (0, 0)),
                pl.BlockSpec((Cin, 1), lambda n: (0, 0)),
                pl.BlockSpec((Cmid, Cin), lambda n: (0, 0)),
                pl.BlockSpec((Cmid, 1), lambda n: (0, 0)),
                pl.BlockSpec((Cmid, 1), lambda n: (0, 0)),
                pl.BlockSpec((3, G, 3 * Cmid), lambda n: (0, 0, 0)),
                pl.BlockSpec((1, HW), lambda n: (0, 0)),
                pl.BlockSpec((1, HW), lambda n: (0, 0)),
            ],
            out_specs=pl.BlockSpec((1, G + Cin, HW), lambda n: (n, 0, 0)),
            scratch_shapes=[
                pltpu.VMEM((3 * Cmid, 2 * PAD + HW), jnp.bfloat16)],
        ),
        compiler_params=pltpu.CompilerParams(
            dimension_semantics=("parallel",),
            vmem_limit_bytes=32 * 1024 * 1024),
        cost_estimate=cost,
    )(x_flat, s1, b1, w1t.astype(jnp.bfloat16), s2, b2,
      w2g.astype(jnp.bfloat16), mask_l, mask_r)

    # Free reshape back to NCHW; channel order is already [new_features, x].
    return out_flat.reshape(N, G + Cin, H, W)


# ----------------------------------------------------------------------------
# Pure-JAX reference (same math, same bf16 MXU casts) for the sanity check
# ----------------------------------------------------------------------------
def reference_forward(x_nchw, params):
    s1, b1, w1t, s2, b2, w2g = params
    N, Cin, H, W = x_nchw.shape
    Cmid, G = w1t.shape[0], w2g.shape[1]
    x = jnp.transpose(x_nchw, (0, 2, 3, 1))                       # NHWC f32
    h1 = jnp.maximum(x * s1[:, 0] + b1[:, 0], 0.0)
    mid = jnp.dot(h1.reshape(N * H * W, Cin).astype(jnp.bfloat16),
                  jnp.transpose(w1t).astype(jnp.bfloat16),
                  preferred_element_type=jnp.float32).reshape(N, H, W, Cmid)
    mid = jnp.maximum(mid * s2[:, 0] + b2[:, 0], 0.0)
    # (ky, g, kx, c) -> HWIO (ky, kx, c, g)
    w_hwio = jnp.transpose(w2g.reshape(3, G, 3, Cmid), (0, 2, 3, 1))
    new = jax.lax.conv_general_dilated(
        mid.astype(jnp.bfloat16), w_hwio.astype(jnp.bfloat16),
        window_strides=(1, 1), padding=((1, 1), (1, 1)),
        dimension_numbers=("NHWC", "HWIO", "NHWC"),
        preferred_element_type=jnp.float32)
    out_nhwc = jnp.concatenate([new, x], axis=-1)
    return jnp.transpose(out_nhwc, (0, 3, 1, 2))


# ----------------------------------------------------------------------------
def make_params(key, in_planes, growth_rate, eps=1e-5):
    Cmid, G = 4 * growth_rate, growth_rate
    ks = jax.random.split(key, 10)

    def folded_bn(kg, kb, km, kv, c):
        gamma = jax.random.uniform(kg, (c,), jnp.float32, 0.5, 1.5)
        beta = 0.1 * jax.random.normal(kb, (c,), jnp.float32)
        mean = 0.1 * jax.random.normal(km, (c,), jnp.float32)
        var = jax.random.uniform(kv, (c,), jnp.float32, 0.5, 1.5)
        scale = gamma / jnp.sqrt(var + eps)
        shift = beta - mean * scale
        return scale.reshape(c, 1), shift.reshape(c, 1)

    s1, b1 = folded_bn(ks[0], ks[1], ks[2], ks[3], in_planes)
    s2, b2 = folded_bn(ks[4], ks[5], ks[6], ks[7], Cmid)

    lim1 = 1.0 / (in_planes ** 0.5)
    # torch conv1.weight[:, :, 0, 0]  -> (Cmid, Cin)
    w1t = jax.random.uniform(ks[8], (Cmid, in_planes), jnp.float32, -lim1, lim1)
    lim2 = 1.0 / ((Cmid * 9) ** 0.5)
    # torch conv2.weight (G, Cmid, 3, 3) -> kernel layout (ky, g, kx*Cmid + c)
    w2_t = jax.random.uniform(ks[9], (G, Cmid, 3, 3), jnp.float32, -lim2, lim2)
    w2g = jnp.transpose(w2_t, (2, 0, 3, 1)).reshape(3, G, 3 * Cmid)
    return (s1, b1, w1t, s2, b2, w2g)


if __name__ == "__main__":
    key = jax.random.PRNGKey(0)
    kx, kp = jax.random.split(key)

    N, in_planes, growth_rate, H, W = 2, 32, 8, 16, 16
    x = jax.random.normal(kx, (N, in_planes, H, W), jnp.float32)
    params = make_params(kp, in_planes, growth_rate)

    out = jax.block_until_ready(bottleneck_forward(x, params))
    ref = reference_forward(x, params)

    assert out.shape == (N, growth_rate + in_planes, H, W), out.shape
    err = float(jnp.max(jnp.abs(out - ref)))
    assert jnp.allclose(out, ref, atol=2e-2, rtol=2e-2), f"max abs err {err}"
    print("KERNEL_OK")
</pallas_src>

<mosaic_0001>
module attributes {stable_mosaic.version = 11 : i64} {
  func.func @_bottleneck_kernel(%arg0: i32, %arg1: memref<1x32x256xf32, #tpu.memory_space<vmem>>, %arg2: memref<32x1xf32, #tpu.memory_space<vmem>>, %arg3: memref<32x1xf32, #tpu.memory_space<vmem>>, %arg4: memref<32x32xbf16, #tpu.memory_space<vmem>>, %arg5: memref<32x1xf32, #tpu.memory_space<vmem>>, %arg6: memref<32x1xf32, #tpu.memory_space<vmem>>, %arg7: memref<3x8x96xbf16, #tpu.memory_space<vmem>>, %arg8: memref<1x256xbf16, #tpu.memory_space<vmem>>, %arg9: memref<1x256xbf16, #tpu.memory_space<vmem>>, %arg10: memref<1x40x256xf32, #tpu.memory_space<vmem>>, %arg11: memref<96x512xbf16, #tpu.memory_space<vmem>>) attributes {dimension_semantics = [#tpu.dimension_semantics<parallel>], iteration_bounds = array<i64: 2>, scalar_prefetch = 0 : i64, scratch_operands = 1 : i64, tpu.core_type = #tpu.core_type<tc>, window_params = [{transform_indices = @transform_0, window_bounds = array<i64: 1, 32, 256>}, {pipeline_mode = #tpu.pipeline_mode<synchronous>, transform_indices = @transform_1, window_bounds = array<i64: 32, 1>}, {pipeline_mode = #tpu.pipeline_mode<synchronous>, transform_indices = @transform_2, window_bounds = array<i64: 32, 1>}, {pipeline_mode = #tpu.pipeline_mode<synchronous>, transform_indices = @transform_3, window_bounds = array<i64: 32, 32>}, {pipeline_mode = #tpu.pipeline_mode<synchronous>, transform_indices = @transform_4, window_bounds = array<i64: 32, 1>}, {pipeline_mode = #tpu.pipeline_mode<synchronous>, transform_indices = @transform_5, window_bounds = array<i64: 32, 1>}, {pipeline_mode = #tpu.pipeline_mode<synchronous>, transform_indices = @transform_6, window_bounds = array<i64: 3, 8, 96>}, {pipeline_mode = #tpu.pipeline_mode<synchronous>, transform_indices = @transform_7, window_bounds = array<i64: 1, 256>}, {pipeline_mode = #tpu.pipeline_mode<synchronous>, transform_indices = @transform_8, window_bounds = array<i64: 1, 256>}, {transform_indices = @transform_9, window_bounds = array<i64: 1, 40, 256>}]} {
    %c0 = arith.constant 0 : index
    %c0_0 = arith.constant 0 : index
    %c0_1 = arith.constant 0 : index
    %0 = vector.load %arg1[%c0, %c0_0, %c0_1] : memref<1x32x256xf32, #tpu.memory_space<vmem>>, vector<1x32x256xf32>
    %1 = vector.shape_cast %0 : vector<1x32x256xf32> to vector<32x256xf32>
    %c0_2 = arith.constant 0 : index
    %c0_3 = arith.constant 0 : index
    %2 = vector.load %arg2[%c0_2, %c0_3] : memref<32x1xf32, #tpu.memory_space<vmem>>, vector<32x1xf32>
    %3 = vector.broadcast %2 : vector<32x1xf32> to vector<32x256xf32>
    %4 = arith.mulf %1, %3 : vector<32x256xf32>
    %c0_4 = arith.constant 0 : index
    %c0_5 = arith.constant 0 : index
    %5 = vector.load %arg3[%c0_4, %c0_5] : memref<32x1xf32, #tpu.memory_space<vmem>>, vector<32x1xf32>
    %6 = vector.broadcast %5 : vector<32x1xf32> to vector<32x256xf32>
    %7 = arith.addf %4, %6 : vector<32x256xf32>
    %cst = arith.constant 0.000000e+00 : f32
    %8 = vector.broadcast %cst : f32 to vector<32x256xf32>
    %9 = arith.maximumf %7, %8 : vector<32x256xf32>
    %10 = arith.truncf %9 : vector<32x256xf32> to vector<32x256xbf16>
    %c0_6 = arith.constant 0 : index
    %c0_7 = arith.constant 0 : index
    %11 = vector.load %arg4[%c0_6, %c0_7] : memref<32x32xbf16, #tpu.memory_space<vmem>>, vector<32x32xbf16>
    %cst_8 = arith.constant dense<0.000000e+00> : vector<32x256xf32>
    %12 = tpu.matmul %11, %10, %cst_8 {dimension_numbers = #tpu.dot_dimension_numbers<[1], [0], [0], [1], [0, 0, 1, 1], [], []>} : vector<32x32xbf16>, vector<32x256xbf16>, vector<32x256xf32> -> vector<32x256xf32>
    %c0_9 = arith.constant 0 : index
    %c0_10 = arith.constant 0 : index
    %13 = vector.load %arg5[%c0_9, %c0_10] : memref<32x1xf32, #tpu.memory_space<vmem>>, vector<32x1xf32>
    %14 = vector.broadcast %13 : vector<32x1xf32> to vector<32x256xf32>
    %15 = arith.mulf %12, %14 : vector<32x256xf32>
    %c0_11 = arith.constant 0 : index
    %c0_12 = arith.constant 0 : index
    %16 = vector.load %arg6[%c0_11, %c0_12] : memref<32x1xf32, #tpu.memory_space<vmem>>, vector<32x1xf32>
    %17 = vector.broadcast %16 : vector<32x1xf32> to vector<32x256xf32>
    %18 = arith.addf %15, %17 : vector<32x256xf32>
    %cst_13 = arith.constant 0.000000e+00 : f32
    %19 = vector.broadcast %cst_13 : f32 to vector<32x256xf32>
    %20 = arith.maximumf %18, %19 : vector<32x256xf32>
    %21 = arith.truncf %20 : vector<32x256xf32> to vector<32x256xbf16>
    %cst_14 = arith.constant 0.000000e+00 : bf16
    %22 = vector.broadcast %cst_14 : bf16 to vector<96x128xbf16>
    %c0_15 = arith.constant 0 : index
    %c0_16 = arith.constant 0 : index
    %23 = vector.load %arg11[%c0_15, %c0_16] : memref<96x512xbf16, #tpu.memory_space<vmem>>, vector<96x128xbf16>
    tpu.vector_store %arg11[%c0_15, %c0_16], %22 {strides = array<i32>} : memref<96x512xbf16, #tpu.memory_space<vmem>>, vector<96x128xbf16>,
    %cst_17 = arith.constant 0.000000e+00 : bf16
    %24 = vector.broadcast %cst_17 : bf16 to vector<96x128xbf16>
    %c0_18 = arith.constant 0 : index
    %c384 = arith.constant 384 : index
    %25 = vector.load %arg11[%c0_18, %c384] : memref<96x512xbf16, #tpu.memory_space<vmem>>, vector<96x128xbf16>
    tpu.vector_store %arg11[%c0_18, %c384], %24 {strides = array<i32>} : memref<96x512xbf16, #tpu.memory_space<vmem>>, vector<96x128xbf16>,
    %c32 = arith.constant 32 : index
    %c128 = arith.constant 128 : index
    %26 = vector.load %arg11[%c32, %c128] : memref<96x512xbf16, #tpu.memory_space<vmem>>, vector<32x256xbf16>
    tpu.vector_store %arg11[%c32, %c128], %21 {strides = array<i32>} : memref<96x512xbf16, #tpu.memory_space<vmem>>, vector<32x256xbf16>,
    %c32_19 = arith.constant 32 : index
    %c127 = arith.constant 127 : index
    %27 = vector.load %arg11[%c32_19, %c127] : memref<96x512xbf16, #tpu.memory_space<vmem>>, vector<32x256xbf16>
    %c0_20 = arith.constant 0 : index
    %c0_21 = arith.constant 0 : index
    %28 = vector.load %arg8[%c0_20, %c0_21] : memref<1x256xbf16, #tpu.memory_space<vmem>>, vector<1x256xbf16>
    %29 = vector.broadcast %28 : vector<1x256xbf16> to vector<32x256xbf16>
    %30 = arith.mulf %27, %29 : vector<32x256xbf16>
    %c0_22 = arith.constant 0 : index
    %c128_23 = arith.constant 128 : index
    %31 = vector.load %arg11[%c0_22, %c128_23] : memref<96x512xbf16, #tpu.memory_space<vmem>>, vector<32x256xbf16>
    tpu.vector_store %arg11[%c0_22, %c128_23], %30 {strides = array<i32>} : memref<96x512xbf16, #tpu.memory_space<vmem>>, vector<32x256xbf16>,
    %c32_24 = arith.constant 32 : index
    %c129 = arith.constant 129 : index
    %32 = vector.load %arg11[%c32_24, %c129] : memref<96x512xbf16, #tpu.memory_space<vmem>>, vector<32x256xbf16>
    %c0_25 = arith.constant 0 : index
    %c0_26 = arith.constant 0 : index
    %33 = vector.load %arg9[%c0_25, %c0_26] : memref<1x256xbf16, #tpu.memory_space<vmem>>, vector<1x256xbf16>
    %34 = vector.broadcast %33 : vector<1x256xbf16> to vector<32x256xbf16>
    %35 = arith.mulf %32, %34 : vector<32x256xbf16>
    %c64 = arith.constant 64 : index
    %c128_27 = arith.constant 128 : index
    %36 = vector.load %arg11[%c64, %c128_27] : memref<96x512xbf16, #tpu.memory_space<vmem>>, vector<32x256xbf16>
    tpu.vector_store %arg11[%c64, %c128_27], %35 {strides = array<i32>} : memref<96x512xbf16, #tpu.memory_space<vmem>>, vector<32x256xbf16>,
    %cst_28 = arith.constant 0.000000e+00 : f32
    %37 = vector.broadcast %cst_28 : f32 to vector<8x256xf32>
    %c0_29 = arith.constant 0 : index
    %c0_30 = arith.constant 0 : index
    %c0_31 = arith.constant 0 : index
    %38 = vector.load %arg7[%c0_29, %c0_30, %c0_31] : memref<3x8x96xbf16, #tpu.memory_space<vmem>>, vector<1x8x96xbf16>
    %39 = vector.shape_cast %38 : vector<1x8x96xbf16> to vector<8x96xbf16>
    %c0_32 = arith.constant 0 : index
    %c112 = arith.constant 112 : index
    %40 = vector.load %arg11[%c0_32, %c112] : memref<96x512xbf16, #tpu.memory_space<vmem>>, vector<96x256xbf16>
    %cst_33 = arith.constant dense<0.000000e+00> : vector<8x256xf32>
    %41 = tpu.matmul %39, %40, %cst_33 {dimension_numbers = #tpu.dot_dimension_numbers<[1], [0], [0], [1], [0, 0, 1, 1], [], []>} : vector<8x96xbf16>, vector<96x256xbf16>, vector<8x256xf32> -> vector<8x256xf32>
    %42 = arith.addf %37, %41 : vector<8x256xf32>
    %c1 = arith.constant 1 : index
    %c0_34 = arith.constant 0 : index
    %c0_35 = arith.constant 0 : index
    %43 = vector.load %arg7[%c1, %c0_34, %c0_35] : memref<3x8x96xbf16, #tpu.memory_space<vmem>>, vector<1x8x96xbf16>
    %44 = vector.shape_cast %43 : vector<1x8x96xbf16> to vector<8x96xbf16>
    %c0_36 = arith.constant 0 : index
    %c128_37 = arith.constant 128 : index
    %45 = vector.load %arg11[%c0_36, %c128_37] : memref<96x512xbf16, #tpu.memory_space<vmem>>, vector<96x256xbf16>
    %cst_38 = arith.constant dense<0.000000e+00> : vector<8x256xf32>
    %46 = tpu.matmul %44, %45, %cst_38 {dimension_numbers = #tpu.dot_dimension_numbers<[1], [0], [0], [1], [0, 0, 1, 1], [], []>} : vector<8x96xbf16>, vector<96x256xbf16>, vector<8x256xf32> -> vector<8x256xf32>
    %47 = arith.addf %42, %46 : vector<8x256xf32>
    %c2 = arith.constant 2 : index
    %c0_39 = arith.constant 0 : index
    %c0_40 = arith.constant 0 : index
    %48 = vector.load %arg7[%c2, %c0_39, %c0_40] : memref<3x8x96xbf16, #tpu.memory_space<vmem>>, vector<1x8x96xbf16>
    %49 = vector.shape_cast %48 : vector<1x8x96xbf16> to vector<8x96xbf16>
    %c0_41 = arith.constant 0 : index
    %c144 = arith.constant 144 : index
    %50 = vector.load %arg11[%c0_41, %c144] : memref<96x512xbf16, #tpu.memory_space<vmem>>, vector<96x256xbf16>
    %cst_42 = arith.constant dense<0.000000e+00> : vector<8x256xf32>
    %51 = tpu.matmul %49, %50, %cst_42 {dimension_numbers = #tpu.dot_dimension_numbers<[1], [0], [0], [1], [0, 0, 1, 1], [], []>} : vector<8x96xbf16>, vector<96x256xbf16>, vector<8x256xf32> -> vector<8x256xf32>
    %52 = arith.addf %47, %51 : vector<8x256xf32>
    %53 = vector.shape_cast %52 : vector<8x256xf32> to vector<1x8x256xf32>
    %c0_43 = arith.constant 0 : index
    %c0_44 = arith.constant 0 : index
    %c0_45 = arith.constant 0 : index
    %54 = vector.load %arg10[%c0_43, %c0_44, %c0_45] : memref<1x40x256xf32, #tpu.memory_space<vmem>>, vector<1x8x256xf32>
    tpu.vector_store %arg10[%c0_43, %c0_44, %c0_45], %53 {strides = array<i32>} : memref<1x40x256xf32, #tpu.memory_space<vmem>>, vector<1x8x256xf32>,
    %c0_46 = arith.constant 0 : index
    %c0_47 = arith.constant 0 : index
    %c0_48 = arith.constant 0 : index
    %55 = vector.load %arg1[%c0_46, %c0_47, %c0_48] : memref<1x32x256xf32, #tpu.memory_space<vmem>>, vector<1x32x256xf32>
    %c0_49 = arith.constant 0 : index
    %c8 = arith.constant 8 : index
    %c0_50 = arith.constant 0 : index
    %56 = vector.load %arg10[%c0_49, %c8, %c0_50] : memref<1x40x256xf32, #tpu.memory_space<vmem>>, vector<1x32x256xf32>
    tpu.vector_store %arg10[%c0_49, %c8, %c0_50], %55 {strides = array<i32>} : memref<1x40x256xf32, #tpu.memory_space<vmem>>, vector<1x32x256xf32>,
    return
  }
  func.func @transform_0(%arg0: i32) -> (i32, i32, i32) {
    %c0_i32 = arith.constant 0 : i32
    %c0_i32_0 = arith.constant 0 : i32
    %c0_i32_1 = arith.constant 0 : i32
    return %arg0, %c0_i32, %c0_i32_0 : i32, i32, i32
  }
  func.func @transform_1(%arg0: i32) -> (i32, i32) {
    %c0_i32 = arith.constant 0 : i32
    %c0_i32_0 = arith.constant 0 : i32
    %c0_i32_1 = arith.constant 0 : i32
    return %c0_i32, %c0_i32_0 : i32, i32
  }
  func.func @transform_2(%arg0: i32) -> (i32, i32) {
    %c0_i32 = arith.constant 0 : i32
    %c0_i32_0 = arith.constant 0 : i32
    %c0_i32_1 = arith.constant 0 : i32
    return %c0_i32, %c0_i32_0 : i32, i32
  }
  func.func @transform_3(%arg0: i32) -> (i32, i32) {
    %c0_i32 = arith.constant 0 : i32
    %c0_i32_0 = arith.constant 0 : i32
    %c0_i32_1 = arith.constant 0 : i32
    return %c0_i32, %c0_i32_0 : i32, i32
  }
  func.func @transform_4(%arg0: i32) -> (i32, i32) {
    %c0_i32 = arith.constant 0 : i32
    %c0_i32_0 = arith.constant 0 : i32
    %c0_i32_1 = arith.constant 0 : i32
    return %c0_i32, %c0_i32_0 : i32, i32
  }
  func.func @transform_5(%arg0: i32) -> (i32, i32) {
    %c0_i32 = arith.constant 0 : i32
    %c0_i32_0 = arith.constant 0 : i32
    %c0_i32_1 = arith.constant 0 : i32
    return %c0_i32, %c0_i32_0 : i32, i32
  }
  func.func @transform_6(%arg0: i32) -> (i32, i32, i32) {
    %c0_i32 = arith.constant 0 : i32
    %c0_i32_0 = arith.constant 0 : i32
    %c0_i32_1 = arith.constant 0 : i32
    %c0_i32_2 = arith.constant 0 : i32
    return %c0_i32, %c0_i32_0, %c0_i32_1 : i32, i32, i32
  }
  func.func @transform_7(%arg0: i32) -> (i32, i32) {
    %c0_i32 = arith.constant 0 : i32
    %c0_i32_0 = arith.constant 0 : i32
    %c0_i32_1 = arith.constant 0 : i32
    return %c0_i32, %c0_i32_0 : i32, i32
  }
  func.func @transform_8(%arg0: i32) -> (i32, i32) {
    %c0_i32 = arith.constant 0 : i32
    %c0_i32_0 = arith.constant 0 : i32
    %c0_i32_1 = arith.constant 0 : i32
    return %c0_i32, %c0_i32_0 : i32, i32
  }
  func.func @transform_9(%arg0: i32) -> (i32, i32, i32) {
    %c0_i32 = arith.constant 0 : i32
    %c0_i32_0 = arith.constant 0 : i32
    %c0_i32_1 = arith.constant 0 : i32
    return %arg0, %c0_i32, %c0_i32_0 : i32, i32, i32
  }
}

</mosaic_0001>

<llo_original>
// kernel: bottleneck_forward.1
$region0: #{bottleneck_forward.1}
  #allocation0 [shape = 'u32[]', space=smem, size = 0x4, offset = 0x4, fixed_abs, tag = 'smem constant byte address 0x4 - core index']
  #allocation1 [shape = 'u32[144,128]{1,0:T(1,128)}', space=vmem, size = 0x12000, scoped, tag = 'internal scratch']
  #allocation2 [shape = 'bf16[96,512]{1,0:T(16,128)(2,1)}', space=vmem, size = 0x18000, scoped, tag = 'scratch operand']
  %s0 = inlined_call_operand.vmem [shape: f32[2,32,256], index: 0, kind: input, shape index: {}]
  %s1 = inlined_call_operand.vmem [shape: f32[32,1], index: 1, kind: input, shape index: {}]
  %s2 = inlined_call_operand.vmem [shape: f32[32,1], index: 2, kind: input, shape index: {}]
  %s3 = inlined_call_operand.vmem [shape: bf16[32,32], index: 3, kind: input, shape index: {}]
  %s4 = inlined_call_operand.vmem [shape: f32[32,1], index: 4, kind: input, shape index: {}]
  %s5 = inlined_call_operand.vmem [shape: f32[32,1], index: 5, kind: input, shape index: {}]
  %s6 = inlined_call_operand.vmem [shape: bf16[3,8,96], index: 6, kind: input, shape index: {}]
  %s7 = inlined_call_operand.vmem [shape: bf16[1,256], index: 7, kind: input, shape index: {}]
  %s8 = inlined_call_operand.vmem [shape: bf16[1,256], index: 8, kind: input, shape index: {}]
  %s9 = inlined_call_operand.vmem [shape: f32[2,40,256], index: 9, kind: output, shape index: {}]
  %s10 = sld [smem:[#allocation0]]
  $region69: #{bottleneck_forward.1} parent=0
    _
  %s12 = ssub.s32 1, %s10
  %s13 = scalar_select 0, %s12, %s10
  loop: start=0, step=1, limit=4
  $region2: #{bottleneck_forward.1} parent=0 // loop_pre_header
    _
  $region3: #{bottleneck_forward.1} parent=0 // loop_header
    %s15 = sphi 0, %s19
    %p16 = scmp.ge.s32.totalorder %s15, 4
    %s25 = sphi 0, %s27
    %s28 = sphi 0, %s25
    %s29 = sphi 0, %s28
    %s45 = sphi 0, %s29
    %s49 = sphi 0, %s49
    %s51 = sphi 0, %s49
    %s52 = sphi 0, %s51
    %s66 = sphi 0, %s52
    %s70 = sphi 0, %s70
    %s72 = sphi 0, %s70
    %s73 = sphi 0, %s72
    %s87 = sphi 0, %s73
    %s91 = sphi 0, %s91
    %s93 = sphi 0, %s91
    %s94 = sphi 0, %s93
    %s108 = sphi 0, %s94
    %s112 = sphi 0, %s112
    %s114 = sphi 0, %s112
    %s115 = sphi 0, %s114
    %s129 = sphi 0, %s115
    %s133 = sphi 0, %s133
    %s135 = sphi 0, %s133
    %s136 = sphi 0, %s135
    %s150 = sphi 0, %s136
    %s154 = sphi 0, %s154
    %s156 = sphi 0, %s154
    %s157 = sphi 0, %s156
    %s171 = sphi 0, %s157
    %s175 = sphi 0, %s175
    %s177 = sphi 0, %s175
    %s178 = sphi 0, %s177
    %s192 = sphi 0, %s178
    %s196 = sphi 0, %s196
    %s198 = sphi 0, %s196
    %s199 = sphi 0, %s198
    %s213 = sphi 0, %s199
    %s219 = sphi 0, %s221
    %s222 = sphi 0, %s219
    %s223 = sphi 0, %s222
    %s239 = sphi 0, %s223
  $region4: #{bottleneck_forward.1} parent=0 // loop_header_branch
    %18 = sbr.rel (%p16) target = $region8
  $region5: #{bottleneck_forward.1} parent=0 // loop_body
    %s20 = ssub.s32 %s15, 1
    %s21 = ssub.s32 %s15, 2
    %s22 = sadd.s32 %s15, 1
    %s23 = ssub.s32 %s15, %s22
    %p24 = scmp.eq.s32.totalorder %s23, 0
    %s26 = sadd.s32 %s25, 1
    %s27 = scalar_select %p24, %s25, %s26
    %p30 = pneg %p24
    %p31 = scmp.eq.s32.totalorder %s15, 1
    %p32 = por %p30, %p31
    %p33 = scmp.ne.s32.totalorder %s25, %s28
    %p34 = scmp.eq.s32.totalorder %s15, 0
    %p35 = por %p33, %p34
    %p36 = scmp.ne.s32.totalorder %s25, %s28
    %p37 = scmp.eq.s32.totalorder %s20, 1
    %p38 = por %p36, %p37
    %p39 = scmp.ne.s32.totalorder %s28, %s29
    %p40 = scmp.eq.s32.totalorder %s20, 0
    %p41 = por %p39, %p40
    %p42 = scmp.ne.s32.totalorder %s28, %s29
    %p43 = scmp.eq.s32.totalorder %s21, 1
    %p44 = por %p42, %p43
    %p46 = scmp.ne.s32.totalorder %s29, %s45
    %p47 = scmp.eq.s32.totalorder %s21, 0
    %p48 = por %p46, %p47
    %s50 = sadd.s32 %s49, 1
    %p53 = scmp.eq.s32.totalorder %s15, 1
    %p54 = scmp.ne.s32.totalorder %s49, %s51
    %p55 = scmp.eq.s32.totalorder %s15, 0
    %p56 = por %p54, %p55
    %p57 = scmp.ne.s32.totalorder %s49, %s51
    %p58 = scmp.eq.s32.totalorder %s20, 1
    %p59 = por %p57, %p58
    %p60 = scmp.ne.s32.totalorder %s51, %s52
    %p61 = scmp.eq.s32.totalorder %s20, 0
    %p62 = por %p60, %p61
    %p63 = scmp.ne.s32.totalorder %s51, %s52
    %p64 = scmp.eq.s32.totalorder %s21, 1
    %p65 = por %p63, %p64
    %p67 = scmp.ne.s32.totalorder %s52, %s66
    %p68 = scmp.eq.s32.totalorder %s21, 0
    %p69 = por %p67, %p68
    %s71 = sadd.s32 %s70, 1
    %p74 = scmp.eq.s32.totalorder %s15, 1
    %p75 = scmp.ne.s32.totalorder %s70, %s72
    %p76 = scmp.eq.s32.totalorder %s15, 0
    %p77 = por %p75, %p76
    %p78 = scmp.ne.s32.totalorder %s70, %s72
    %p79 = scmp.eq.s32.totalorder %s20, 1
    %p80 = por %p78, %p79
    %p81 = scmp.ne.s32.totalorder %s72, %s73
    %p82 = scmp.eq.s32.totalorder %s20, 0
    %p83 = por %p81, %p82
    %p84 = scmp.ne.s32.totalorder %s72, %s73
    %p85 = scmp.eq.s32.totalorder %s21, 1
    %p86 = por %p84, %p85
    %p88 = scmp.ne.s32.totalorder %s73, %s87
    %p89 = scmp.eq.s32.totalorder %s21, 0
    %p90 = por %p88, %p89
    %s92 = sadd.s32 %s91, 1
    %p95 = scmp.eq.s32.totalorder %s15, 1
    %p96 = scmp.ne.s32.totalorder %s91, %s93
    %p97 = scmp.eq.s32.totalorder %s15, 0
    %p98 = por %p96, %p97
    %p99 = scmp.ne.s32.totalorder %s91, %s93
    %p100 = scmp.eq.s32.totalorder %s20, 1
    %p101 = por %p99, %p100
    %p102 = scmp.ne.s32.totalorder %s93, %s94
    %p103 = scmp.eq.s32.totalorder %s20, 0
    %p104 = por %p102, %p103
    %p105 = scmp.ne.s32.totalorder %s93, %s94
    %p106 = scmp.eq.s32.totalorder %s21, 1
    %p107 = por %p105, %p106
    %p109 = scmp.ne.s32.totalorder %s94, %s108
    %p110 = scmp.eq.s32.totalorder %s21, 0
    %p111 = por %p109, %p110
    %s113 = sadd.s32 %s112, 1
    %p116 = scmp.eq.s32.totalorder %s15, 1
    %p117 = scmp.ne.s32.totalorder %s112, %s114
    %p118 = scmp.eq.s32.totalorder %s15, 0
    %p119 = por %p117, %p118
    %p120 = scmp.ne.s32.totalorder %s112, %s114
    %p121 = scmp.eq.s32.totalorder %s20, 1
    %p122 = por %p120, %p121
    %p123 = scmp.ne.s32.totalorder %s114, %s115
    %p124 = scmp.eq.s32.totalorder %s20, 0
    %p125 = por %p123, %p124
    %p126 = scmp.ne.s32.totalorder %s114, %s115
    %p127 = scmp.eq.s32.totalorder %s21, 1
    %p128 = por %p126, %p127
    %p130 = scmp.ne.s32.totalorder %s115, %s129
    %p131 = scmp.eq.s32.totalorder %s21, 0
    %p132 = por %p130, %p131
    %s134 = sadd.s32 %s133, 1
    %p137 = scmp.eq.s32.totalorder %s15, 1
    %p138 = scmp.ne.s32.totalorder %s133, %s135
    %p139 = scmp.eq.s32.totalorder %s15, 0
    %p140 = por %p138, %p139
    %p141 = scmp.ne.s32.totalorder %s133, %s135
    %p142 = scmp.eq.s32.totalorder %s20, 1
    %p143 = por %p141, %p142
    %p144 = scmp.ne.s32.totalorder %s135, %s136
    %p145 = scmp.eq.s32.totalorder %s20, 0
    %p146 = por %p144, %p145
    %p147 = scmp.ne.s32.totalorder %s135, %s136
    %p148 = scmp.eq.s32.totalorder %s21, 1
    %p149 = por %p147, %p148
    %p151 = scmp.ne.s32.totalorder %s136, %s150
    %p152 = scmp.eq.s32.totalorder %s21, 0
    %p153 = por %p151, %p152
    %s155 = sadd.s32 %s154, 1
    %p158 = scmp.eq.s32.totalorder %s15, 1
    %p159 = scmp.ne.s32.totalorder %s154, %s156
    %p160 = scmp.eq.s32.totalorder %s15, 0
    %p161 = por %p159, %p160
    %p162 = scmp.ne.s32.totalorder %s154, %s156
    %p163 = scmp.eq.s32.totalorder %s20, 1
    %p164 = por %p162, %p163
    %p165 = scmp.ne.s32.totalorder %s156, %s157
    %p166 = scmp.eq.s32.totalorder %s20, 0
    %p167 = por %p165, %p166
    %p168 = scmp.ne.s32.totalorder %s156, %s157
    %p169 = scmp.eq.s32.totalorder %s21, 1
    %p170 = por %p168, %p169
    %p172 = scmp.ne.s32.totalorder %s157, %s171
    %p173 = scmp.eq.s32.totalorder %s21, 0
    %p174 = por %p172, %p173
    %s176 = sadd.s32 %s175, 1
    %p179 = scmp.eq.s32.totalorder %s15, 1
    %p180 = scmp.ne.s32.totalorder %s175, %s177
    %p181 = scmp.eq.s32.totalorder %s15, 0
    %p182 = por %p180, %p181
    %p183 = scmp.ne.s32.totalorder %s175, %s177
    %p184 = scmp.eq.s32.totalorder %s20, 1
    %p185 = por %p183, %p184
    %p186 = scmp.ne.s32.totalorder %s177, %s178
    %p187 = scmp.eq.s32.totalorder %s20, 0
    %p188 = por %p186, %p187
    %p189 = scmp.ne.s32.totalorder %s177, %s178
    %p190 = scmp.eq.s32.totalorder %s21, 1
    %p191 = por %p189, %p190
    %p193 = scmp.ne.s32.totalorder %s178, %s192
    %p194 = scmp.eq.s32.totalorder %s21, 0
    %p195 = por %p193, %p194
    %s197 = sadd.s32 %s196, 1
    %p200 = scmp.eq.s32.totalorder %s15, 1
    %p201 = scmp.ne.s32.totalorder %s196, %s198
    %p202 = scmp.eq.s32.totalorder %s15, 0
    %p203 = por %p201, %p202
    %p204 = scmp.ne.s32.totalorder %s196, %s198
    %p205 = scmp.eq.s32.totalorder %s20, 1
    %p206 = por %p204, %p205
    %p207 = scmp.ne.s32.totalorder %s198, %s199
    %p208 = scmp.eq.s32.totalorder %s20, 0
    %p209 = por %p207, %p208
    %p210 = scmp.ne.s32.totalorder %s198, %s199
    %p211 = scmp.eq.s32.totalorder %s21, 1
    %p212 = por %p210, %p211
    %p214 = scmp.ne.s32.totalorder %s199, %s213
    %p215 = scmp.eq.s32.totalorder %s21, 0
    %p216 = por %p214, %p215
    %s217 = ssub.s32 %s15, %s22
    %p218 = scmp.eq.s32.totalorder %s217, 0
    %s220 = sadd.s32 %s219, 1
    %s221 = scalar_select %p218, %s219, %s220
    %p224 = pneg %p218
    %p225 = scmp.eq.s32.totalorder %s15, 1
    %p226 = por %p224, %p225
    %p227 = scmp.ne.s32.totalorder %s219, %s222
    %p228 = scmp.eq.s32.totalorder %s15, 0
    %p229 = por %p227, %p228
    %p230 = scmp.ne.s32.totalorder %s219, %s222
    %p231 = scmp.eq.s32.totalorder %s20, 1
    %p232 = por %p230, %p231
    %p233 = scmp.ne.s32.totalorder %s222, %s223
    %p234 = scmp.eq.s32.totalorder %s20, 0
    %p235 = por %p233, %p234
    %p236 = scmp.ne.s32.totalorder %s222, %s223
    %p237 = scmp.eq.s32.totalorder %s21, 1
    %p238 = por %p236, %p237
    %p240 = scmp.ne.s32.totalorder %s223, %s239
    %p241 = scmp.eq.s32.totalorder %s21, 0
    %p242 = por %p240, %p241
    %p243 = scmp.le.s32.totalorder 1, %s15
    %p244 = scmp.lt.s32.totalorder %s15, 3
    %p245 = pnand %p243, %p244
    %p246 = pneg %p245
    // Predicated region
    $region9: #{bottleneck_forward.1} parent=5 // pred_check
      _
    $region10: #{bottleneck_forward.1} parent=5 // pred_check_branch
      %248 = sbr.rel (%p245) target = $region12
    $region11: #{bottleneck_forward.1} parent=5 // pred_region
      %s249 = ssub.s32 %s15, 1
      // Predicated region
      $region13: #{bottleneck_forward.1} parent=11 // pred_check
        %p250 = pneg %p62
      $region14: #{bottleneck_forward.1} parent=11 // pred_check_branch
        %252 = sbr.rel (%p250) target = $region16
      $region15: #{bottleneck_forward.1} parent=11 // pred_region
        _
      $region16: #{bottleneck_forward.1} parent=11 // pred_fallthru
        _
      // Predicated region
      $region17: #{bottleneck_forward.1} parent=11 // pred_check
        %p253 = pneg %p83
      $region18: #{bottleneck_forward.1} parent=11 // pred_check_branch
        %255 = sbr.rel (%p253) target = $region20
      $region19: #{bottleneck_forward.1} parent=11 // pred_region
        _
      $region20: #{bottleneck_forward.1} parent=11 // pred_fallthru
        _
      // Predicated region
      $region21: #{bottleneck_forward.1} parent=11 // pred_check
        %p256 = pneg %p104
      $region22: #{bottleneck_forward.1} parent=11 // pred_check_branch
        %258 = sbr.rel (%p256) target = $region24
      $region23: #{bottleneck_forward.1} parent=11 // pred_region
        _
      $region24: #{bottleneck_forward.1} parent=11 // pred_fallthru
        _
      // Predicated region
      $region25: #{bottleneck_forward.1} parent=11 // pred_check
        %p259 = pneg %p125
      $region26: #{bottleneck_forward.1} parent=11 // pred_check_branch
        %261 = sbr.rel (%p259) target = $region28
      $region27: #{bottleneck_forward.1} parent=11 // pred_region
        _
      $region28: #{bottleneck_forward.1} parent=11 // pred_fallthru
        _
      // Predicated region
      $region29: #{bottleneck_forward.1} parent=11 // pred_check
        %p262 = pneg %p146
      $region30: #{bottleneck_forward.1} parent=11 // pred_check_branch
        %264 = sbr.rel (%p262) target = $region32
      $region31: #{bottleneck_forward.1} parent=11 // pred_region
        _
      $region32: #{bottleneck_forward.1} parent=11 // pred_fallthru
        _
      // Predicated region
      $region33: #{bottleneck_forward.1} parent=11 // pred_check
        %p265 = pneg %p167
      $region34: #{bottleneck_forward.1} parent=11 // pred_check_branch
        %267 = sbr.rel (%p265) target = $region36
      $region35: #{bottleneck_forward.1} parent=11 // pred_region
        _
      $region36: #{bottleneck_forward.1} parent=11 // pred_fallthru
        _
      // Predicated region
      $region37: #{bottleneck_forward.1} parent=11 // pred_check
        %p268 = pneg %p188
      $region38: #{bottleneck_forward.1} parent=11 // pred_check_branch
        %270 = sbr.rel (%p268) target = $region40
      $region39: #{bottleneck_forward.1} parent=11 // pred_region
        _
      $region40: #{bottleneck_forward.1} parent=11 // pred_fallthru
        _
      // Predicated region
      $region41: #{bottleneck_forward.1} parent=11 // pred_check
        %p271 = pneg %p209
      $region42: #{bottleneck_forward.1} parent=11 // pred_check_branch
        %273 = sbr.rel (%p271) target = $region44
      $region43: #{bottleneck_forward.1} parent=11 // pred_region
        _
      $region44: #{bottleneck_forward.1} parent=11 // pred_fallthru
        _
    $region12: #{bottleneck_forward.1} parent=5 // pred_fallthru
      _
    %p274 = scmp.lt.s32.totalorder %s15, 2
    // Predicated region
    $region45: #{bottleneck_forward.1} parent=5 // pred_check
      %p275 = pneg %p274
    $region46: #{bottleneck_forward.1} parent=5 // pred_check_branch
      %277 = sbr.rel (%p275) target = $region48
    $region47: #{bottleneck_forward.1} parent=5 // pred_region
      // Predicated region
      $region49: #{bottleneck_forward.1} parent=47 // pred_check
        %p278 = pneg %p35
      $region50: #{bottleneck_forward.1} parent=47 // pred_check_branch
        %280 = sbr.rel (%p278) target = $region52
      $region51: #{bottleneck_forward.1} parent=47 // pred_region
        %p281 = scmp.lt.s32.totalorder %s15, 1
        %s282 = scalar_select %p281, %s15, 1
        %s283 = smul.addr %s282, 8
        %s284 = smul.addr %s283, 8
        %s285 = scalar_lea.vmem %s0, %s284
      $region52: #{bottleneck_forward.1} parent=47 // pred_fallthru
        _
    $region48: #{bottleneck_forward.1} parent=5 // pred_fallthru
      _
    %p286 = scmp.le.s32.totalorder 1, %s15
    %p287 = scmp.lt.s32.totalorder %s15, 3
    %p288 = pnand %p286, %p287
    %p289 = pneg %p288
    // Predicated region
    $region53: #{bottleneck_forward.1} parent=5 // pred_check
      _
    $region54: #{bottleneck_forward.1} parent=5 // pred_check_branch
      %291 = sbr.rel (%p288) target = $region56
    $region55: #{bottleneck_forward.1} parent=5 // pred_region
      %s292 = ssub.s32 %s15, 1
      %p293 = scmp.lt.s32.totalorder %s20, 1
      %s294 = scalar_select %p293, %s20, 1
      %s295 = smul.addr %s294, 8
      %s296 = smul.addr %s295, 8
      %s297 = scalar_lea.vmem %s0, %s296
      %p298 = pneg %p41
      %p299 = pneg %p38
      %p300 = pneg %p62
      %p301 = pneg %p59
      %p302 = pneg %p83
      %p303 = pneg %p80
      %p304 = pneg %p104
      %p305 = pneg %p101
      %p306 = pneg %p125
      %p307 = pneg %p122
      %p308 = pneg %p146
      %p309 = pneg %p143
      %p310 = pneg %p167
      %p311 = pneg %p164
      %p312 = pneg %p188
      %p313 = pneg %p185
      %p314 = pneg %p209
      %p315 = pneg %p206
      %p316 = pneg %p235
      %p317 = pneg %p232
      %p318 = scmp.lt.s32.totalorder %s20, 1
      %s319 = scalar_select %p318, %s20, 1
      %s320 = smul.addr %s319, 10
      %s321 = smul.addr %s320, 8
      %s322 = scalar_lea.vmem %s9, %s321
      %p323 = scmp.lt.s32.totalorder %s20, 1
      %s324 = scalar_select %p323, %s20, 1
      %s325 = smul.addr %s324, 8
      %s326 = smul.addr %s325, 8
      %s327 = scalar_lea.vmem %s0, %s326
      %p328 = scmp.lt.s32.totalorder %s20, 1
      %s329 = scalar_select %p328, %s20, 1
      %s330 = smul.addr %s329, 10
      %s331 = smul.addr %s330, 8
      %s332 = scalar_lea.vmem %s9, %s331
      %v334 = vld [vmem:[%s327] sm:$0xff]
      %v335 = vld [vmem:[%s327 + $0x8] sm:$0xff]
      %v336 = vld [vmem:[%s327 + $0x10] sm:$0xff]
      %v337 = vld [vmem:[%s327 + $0x18] sm:$0xff]
      %v338 = vld [vmem:[%s327 + $0x20] sm:$0xff]
      %v339 = vld [vmem:[%s327 + $0x28] sm:$0xff]
      %v340 = vld [vmem:[%s327 + $0x30] sm:$0xff]
      %v341 = vld [vmem:[%s327 + $0x38] sm:$0xff]
      %v342 = vld [vmem:[%s1] sm:$0xff]
      %v343 = vld [vmem:[%s1 + $0x8] sm:$0xff]
      %v344 = vld [vmem:[%s1 + $0x10] sm:$0xff]
      %v345 = vld [vmem:[%s1 + $0x18] sm:$0xff]
      %347 = vset.pattern.permute.xlu0 0
      %348 = vperm.xlu0 %347, %v342
      %v349 = vpop.permute.xlu0 %348
      %352 = vset.pattern.permute.xlu0 0
      %353 = vperm.xlu0 %352, %v343
      %v354 = vpop.permute.xlu0 %353
      %357 = vset.pattern.permute.xlu0 0
      %358 = vperm.xlu0 %357, %v344
      %v359 = vpop.permute.xlu0 %358
      %362 = vset.pattern.permute.xlu0 0
      %363 = vperm.xlu0 %362, %v345
      %v364 = vpop.permute.xlu0 %363
      %v366 = vmul.f32 %v334, %v349
      %v367 = vmul.f32 %v335, %v349
      %v368 = vmul.f32 %v336, %v354
      %v369 = vmul.f32 %v337, %v354
      %v370 = vmul.f32 %v338, %v359
      %v371 = vmul.f32 %v339, %v359
      %v372 = vmul.f32 %v340, %v364
      %v373 = vmul.f32 %v341, %v364
      %v374 = vld [vmem:[%s2] sm:$0xff]
      %v375 = vld [vmem:[%s2 + $0x8] sm:$0xff]
      %v376 = vld [vmem:[%s2 + $0x10] sm:$0xff]
      %v377 = vld [vmem:[%s2 + $0x18] sm:$0xff]
      %379 = vset.pattern.permute.xlu0 0
      %380 = vperm.xlu0 %379, %v374
      %v381 = vpop.permute.xlu0 %380
      %384 = vset.pattern.permute.xlu0 0
      %385 = vperm.xlu0 %384, %v375
      %v386 = vpop.permute.xlu0 %385
      %389 = vset.pattern.permute.xlu0 0
      %390 = vperm.xlu0 %389, %v376
      %v391 = vpop.permute.xlu0 %390
      %394 = vset.pattern.permute.xlu0 0
      %395 = vperm.xlu0 %394, %v377
      %v396 = vpop.permute.xlu0 %395
      %v398 = vadd.f32 %v366, %v381
      %v399 = vadd.f32 %v367, %v381
      %v400 = vadd.f32 %v368, %v386
      %v401 = vadd.f32 %v369, %v386
      %v402 = vadd.f32 %v370, %v391
      %v403 = vadd.f32 %v371, %v391
      %v404 = vadd.f32 %v372, %v396
      %v405 = vadd.f32 %v373, %v396
      %v406 = vmax.f32 %v398, 0.0
      %v407 = vmax.f32 %v399, 0.0
      %v408 = vmax.f32 %v400, 0.0
      %v409 = vmax.f32 %v401, 0.0
      %v410 = vmax.f32 %v402, 0.0
      %v411 = vmax.f32 %v403, 0.0
      %v412 = vmax.f32 %v404, 0.0
      %v413 = vmax.f32 %v405, 0.0
      %v414 = vpack.c.bf16 %v408, %v406
      %v415 = vpack.c.bf16 %v409, %v407
      %v416 = vpack.c.bf16 %v412, %v410
      %v417 = vpack.c.bf16 %v413, %v411
      %v418 = vld [vmem:[%s3] sm:$0xf]
      %v419 = vld [vmem:[%s3 + $0x4] sm:$0xf]
      %v420 = vld [vmem:[%s3 + $0x8] sm:$0xf]
      %v421 = vld [vmem:[%s3 + $0xc] sm:$0xf]
      %v426 = vunpack.c.l.b16 %v418
      %v427 = vunpack.c.l.b16 %v419
      %v428 = vunpack.c.l.b16 %v420
      %v429 = vunpack.c.l.b16 %v421
      %v430 = vpack.c.b16 %v427, %v426
      %v431 = vpack.c.b16 %v429, %v428
      %vm432 = vcmask 261120
      %v434 = vsel %vm432, %v430, 0
      %v437 = vsel %vm432, %v431, 0
      %439 = vmatprep.subr.bf16.mxu0 %v415
      %440 = vmatpush1.bf16.msra.mxu0 %v414
      %441 = vmatprep.subr.bf16.mxu0 %v417
      %442 = vmatpush1.bf16.msra.mxu0 %v416
      %443 = vmatprep.subr.bf16.mxu0 0
      %444 = vmatpush1.bf16.msra.mxu0 0
      %445 = vmatprep.subr.bf16.mxu0 0
      %446 = vmatpush1.bf16.msra.mxu0 0
      %447 = vmatprep.subr.bf16.mxu0 0
      %448 = vmatpush1.bf16.msra.mxu0 0
      %449 = vmatprep.subr.bf16.mxu0 0
      %450 = vmatpush1.bf16.msra.mxu0 0
      %451 = vmatprep.subr.bf16.mxu0 0
      %452 = vmatpush1.bf16.msra.mxu0 0
      %453 = vmatprep.subr.bf16.mxu0 0
      %454 = vmatpush1.bf16.msra.mxu0 0
      %455 = vmatprep.subr.bf16.mxu0 0
      %456 = vmatpush1.bf16.msra.mxu0 0
      %457 = vmatprep.subr.bf16.mxu0 0
      %458 = vmatpush1.bf16.msra.mxu0 0
      %459 = vmatprep.subr.bf16.mxu0 0
      %460 = vmatpush1.bf16.msra.mxu0 0
      %461 = vmatprep.subr.bf16.mxu0 0
      %462 = vmatpush1.bf16.msra.mxu0 0
      %463 = vmatprep.subr.bf16.mxu0 0
      %464 = vmatpush1.bf16.msra.mxu0 0
      %465 = vmatprep.subr.bf16.mxu0 0
      %466 = vmatpush1.bf16.msra.mxu0 0
      %467 = vmatprep.subr.bf16.mxu0 0
      %468 = vmatpush1.bf16.msra.mxu0 0
      %469 = vmatprep.subr.bf16.mxu0 0
      %470 = vmatpush1.bf16.msra.mxu0 0
      %471 = vmatprep.mubr.bf16.mxu0 0
      %472 = vmatmul.mubr.bf16.gmra.mrb[0].mxu0 %v434
      %v473 = vpop.f32.mrb[0].mxu0
      %v474 = vadd.f32 0.0, %v473
      %v475 = vpop.f32.mrb[0].mxu0
      %v476 = vadd.f32 0.0, %v475
      %v477 = vpop.f32.mrb[0].mxu0
      %v478 = vadd.f32 0.0, %v477
      %v479 = vpop.f32.mrb[0].mxu0
      %v480 = vadd.f32 0.0, %v479
      %481 = vmatprep.mubr.bf16.mxu0 0
      %482 = vmatmul.mubr.bf16.gmra.mrb[0].mxu0 %v437
      %v483 = vpop.f32.mrb[0].mxu0
      %v484 = vadd.f32 0.0, %v483
      %v485 = vpop.f32.mrb[0].mxu0
      %v486 = vadd.f32 0.0, %v485
      %v487 = vpop.f32.mrb[0].mxu0
      %v488 = vadd.f32 0.0, %v487
      %v489 = vpop.f32.mrb[0].mxu0
      %v490 = vadd.f32 0.0, %v489
      %491 = vdwg.mxu0
      %v492 = vld [vmem:[%s4] sm:$0xff]
      %v493 = vld [vmem:[%s4 + $0x8] sm:$0xff]
      %v494 = vld [vmem:[%s4 + $0x10] sm:$0xff]
      %v495 = vld [vmem:[%s4 + $0x18] sm:$0xff]
      %497 = vset.pattern.permute.xlu0 0
      %498 = vperm.xlu0 %497, %v492
      %v499 = vpop.permute.xlu0 %498
      %502 = vset.pattern.permute.xlu0 0
      %503 = vperm.xlu0 %502, %v493
      %v504 = vpop.permute.xlu0 %503
      %507 = vset.pattern.permute.xlu0 0
      %508 = vperm.xlu0 %507, %v494
      %v509 = vpop.permute.xlu0 %508
      %512 = vset.pattern.permute.xlu0 0
      %513 = vperm.xlu0 %512, %v495
      %v514 = vpop.permute.xlu0 %513
      %v516 = vmul.f32 %v474, %v499
      %v517 = vmul.f32 %v476, %v499
      %v518 = vmul.f32 %v478, %v504
      %v519 = vmul.f32 %v480, %v504
      %v520 = vmul.f32 %v484, %v509
      %v521 = vmul.f32 %v486, %v509
      %v522 = vmul.f32 %v488, %v514
      %v523 = vmul.f32 %v490, %v514
      %v524 = vld [vmem:[%s5] sm:$0xff]
      %v525 = vld [vmem:[%s5 + $0x8] sm:$0xff]
      %v526 = vld [vmem:[%s5 + $0x10] sm:$0xff]
      %v527 = vld [vmem:[%s5 + $0x18] sm:$0xff]
      %529 = vset.pattern.permute.xlu0 0
      %530 = vperm.xlu0 %529, %v524
      %v531 = vpop.permute.xlu0 %530
      %534 = vset.pattern.permute.xlu0 0
      %535 = vperm.xlu0 %534, %v525
      %v536 = vpop.permute.xlu0 %535
      %539 = vset.pattern.permute.xlu0 0
      %540 = vperm.xlu0 %539, %v526
      %v541 = vpop.permute.xlu0 %540
      %544 = vset.pattern.permute.xlu0 0
      %545 = vperm.xlu0 %544, %v527
      %v546 = vpop.permute.xlu0 %545
      %v548 = vadd.f32 %v516, %v531
      %v549 = vadd.f32 %v517, %v531
      %v550 = vadd.f32 %v518, %v536
      %v551 = vadd.f32 %v519, %v536
      %v552 = vadd.f32 %v520, %v541
      %v553 = vadd.f32 %v521, %v541
      %v554 = vadd.f32 %v522, %v546
      %v555 = vadd.f32 %v523, %v546
      %v556 = vmax.f32 %v548, 0.0
      %v557 = vmax.f32 %v549, 0.0
      %v558 = vmax.f32 %v550, 0.0
      %v559 = vmax.f32 %v551, 0.0
      %v560 = vmax.f32 %v552, 0.0
      %v561 = vmax.f32 %v553, 0.0
      %v562 = vmax.f32 %v554, 0.0
      %v563 = vmax.f32 %v555, 0.0
      %v564 = vpack.c.bf16 %v558, %v556
      %v565 = vpack.c.bf16 %v559, %v557
      %v566 = vpack.c.bf16 %v562, %v560
      %v567 = vpack.c.bf16 %v563, %v561
      %568 = vst [vmem:[#allocation2] sm:$0xff] 0
      %569 = vst [vmem:[#allocation2 + $0x20] sm:$0xff] 0
      %570 = vst [vmem:[#allocation2 + $0x40] sm:$0xff] 0
      %571 = vst [vmem:[#allocation2 + $0x60] sm:$0xff] 0
      %572 = vst [vmem:[#allocation2 + $0x80] sm:$0xff] 0
      %573 = vst [vmem:[#allocation2 + $0xa0] sm:$0xff] 0
      %574 = vst [vmem:[#allocation2 + $0x18] sm:$0xff] 0
      %575 = vst [vmem:[#allocation2 + $0x38] sm:$0xff] 0
      %576 = vst [vmem:[#allocation2 + $0x58] sm:$0xff] 0
      %577 = vst [vmem:[#allocation2 + $0x78] sm:$0xff] 0
      %578 = vst [vmem:[#allocation2 + $0x98] sm:$0xff] 0
      %579 = vst [vmem:[#allocation2 + $0xb8] sm:$0xff] 0
      %580 = vst [vmem:[#allocation2 + $0x48] sm:$0xff] %v564
      %581 = vst [vmem:[#allocation2 + $0x50] sm:$0xff] %v565
      %582 = vst [vmem:[#allocation2 + $0x68] sm:$0xff] %v566
      %583 = vst [vmem:[#allocation2 + $0x70] sm:$0xff] %v567
      %v584 = vld [vmem:[#allocation2 + $0x40] sm:$0xff]
      %v585 = vld [vmem:[#allocation2 + $0x48] sm:$0xff]
      %v586 = vld [vmem:[#allocation2 + $0x50] sm:$0xff]
      %v587 = vld [vmem:[#allocation2 + $0x60] sm:$0xff]
      %v588 = vld [vmem:[#allocation2 + $0x68] sm:$0xff]
      %v589 = vld [vmem:[#allocation2 + $0x70] sm:$0xff]
      %v590 = vld [vmem:[%s7] sm:$0x3]
      %v593 = vunpack.c.l.s4 1966171168
      %v594 = vunpack.c.0.s8 %v593
      %v595 = vlaneseq
      %v596 = vshrl.u32 %v595, 7
      %v597 = vsub.s32 %v594, %v596
      %v598 = vrot.slane %v590, %v597
      %v599 = vcombine.high %v598, %v598
      %v601 = vunpack.c.l.s4 1966171168
      %v602 = vunpack.c.0.s8 %v601
      %v603 = vlaneseq
      %v604 = vshrl.u32 %v603, 7
      %v605 = vsub.s32 %v602, %v604
      %v606 = vrot.slane %v598, %v605
      %v608 = vunpack.c.l.s4 1966171168
      %v609 = vunpack.c.0.s8 %v608
      %v610 = vlaneseq
      %v611 = vshrl.u32 %v610, 7
      %v612 = vsub.s32 %v609, %v611
      %v613 = vrot.slane %v599, %v612
      %v615 = vpack.i.b16 %v606, %v606
      %v617 = vlaneseq
      %v618 = vshrl.u32 %v617, 7
      %v619 = vsub.s32 0, %v618
      %v620 = vrot.slane %v615, %v619
      %v622 = vpack.i.b16 %v613, %v613
      %v624 = vlaneseq
      %v625 = vshrl.u32 %v624, 7
      %v626 = vsub.s32 0, %v625
      %v627 = vrot.slane %v622, %v626
      %630 = vrot.lane.b32.xlu0 %v620, 127
      %v631 = vpop.permute.xlu0 %630
      %632 = vrot.lane.b32.xlu0 %v627, 127
      %v633 = vpop.permute.xlu0 %632
      %vm634 = vcmask 1039360
      %v635 = vsel %vm634, %v631, %v633
      %v639 = vmul.bf16 %v584, %v631
      %v640 = vmul.bf16 %v585, %v635
      %v641 = vmul.bf16 %v586, %v633
      %v642 = vmul.bf16 %v587, %v631
      %v643 = vmul.bf16 %v588, %v635
      %v644 = vmul.bf16 %v589, %v633
      %651 = vrot.lane.b32.xlu0 %v639, 1
      %v652 = vpop.permute.xlu0 %651
      %653 = vrot.lane.b32.xlu0 %v640, 1
      %v654 = vpop.permute.xlu0 %653
      %655 = vrot.lane.b32.xlu0 %v641, 1
      %v656 = vpop.permute.xlu0 %655
      %657 = vrot.lane.b32.xlu0 %v642, 1
      %v658 = vpop.permute.xlu0 %657
      %659 = vrot.lane.b32.xlu0 %v643, 1
      %v660 = vpop.permute.xlu0 %659
      %661 = vrot.lane.b32.xlu0 %v644, 1
      %v662 = vpop.permute.xlu0 %661
      %vm663 = vcmask 7168
      %v664 = vsel %vm663, %v652, %v654
      %v665 = vsel %vm663, %v654, %v656
      %v666 = vsel %vm663, %v658, %v660
      %v667 = vsel %vm663, %v660, %v662
      %672 = vst [vmem:[#allocation2 + $0x8] sm:$0xff] %v664
      %673 = vst [vmem:[#allocation2 + $0x10] sm:$0xff] %v665
      %674 = vst [vmem:[#allocation2 + $0x28] sm:$0xff] %v666
      %675 = vst [vmem:[#allocation2 + $0x30] sm:$0xff] %v667
      %v676 = vld [vmem:[#allocation2 + $0x48] sm:$0xff]
      %v677 = vld [vmem:[#allocation2 + $0x50] sm:$0xff]
      %v678 = vld [vmem:[#allocation2 + $0x58] sm:$0xff]
      %v679 = vld [vmem:[#allocation2 + $0x68] sm:$0xff]
      %v680 = vld [vmem:[#allocation2 + $0x70] sm:$0xff]
      %v681 = vld [vmem:[#allocation2 + $0x78] sm:$0xff]
      %v682 = vld [vmem:[%s8] sm:$0x3]
      %v685 = vunpack.c.l.s4 1966171168
      %v686 = vunpack.c.0.s8 %v685
      %v687 = vlaneseq
      %v688 = vshrl.u32 %v687, 7
      %v689 = vsub.s32 %v686, %v688
      %v690 = vrot.slane %v682, %v689
      %v691 = vcombine.high %v690, %v690
      %v693 = vunpack.c.l.s4 1966171168
      %v694 = vunpack.c.0.s8 %v693
      %v695 = vlaneseq
      %v696 = vshrl.u32 %v695, 7
      %v697 = vsub.s32 %v694, %v696
      %v698 = vrot.slane %v690, %v697
      %v700 = vunpack.c.l.s4 1966171168
      %v701 = vunpack.c.0.s8 %v700
      %v702 = vlaneseq
      %v703 = vshrl.u32 %v702, 7
      %v704 = vsub.s32 %v701, %v703
      %v705 = vrot.slane %v691, %v704
      %v707 = vpack.i.b16 %v698, %v698
      %v709 = vlaneseq
      %v710 = vshrl.u32 %v709, 7
      %v711 = vsub.s32 0, %v710
      %v712 = vrot.slane %v707, %v711
      %v714 = vpack.i.b16 %v705, %v705
      %v716 = vlaneseq
      %v717 = vshrl.u32 %v716, 7
      %v718 = vsub.s32 0, %v717
      %v719 = vrot.slane %v714, %v718
      %722 = vrot.lane.b32.xlu0 %v712, 1
      %v723 = vpop.permute.xlu0 %722
      %724 = vrot.lane.b32.xlu0 %v719, 1
      %v725 = vpop.permute.xlu0 %724
      %v726 = vsel %vm663, %v723, %v725
      %v730 = vmul.bf16 %v676, %v723
      %v731 = vmul.bf16 %v677, %v726
      %v732 = vmul.bf16 %v678, %v725
      %v733 = vmul.bf16 %v679, %v723
      %v734 = vmul.bf16 %v680, %v726
      %v735 = vmul.bf16 %v681, %v725
      %742 = vrot.lane.b32.xlu0 %v730, 127
      %v743 = vpop.permute.xlu0 %742
      %744 = vrot.lane.b32.xlu0 %v731, 127
      %v745 = vpop.permute.xlu0 %744
      %746 = vrot.lane.b32.xlu0 %v732, 127
      %v747 = vpop.permute.xlu0 %746
      %748 = vrot.lane.b32.xlu0 %v733, 127
      %v749 = vpop.permute.xlu0 %748
      %750 = vrot.lane.b32.xlu0 %v734, 127
      %v751 = vpop.permute.xlu0 %750
      %752 = vrot.lane.b32.xlu0 %v735, 127
      %v753 = vpop.permute.xlu0 %752
      %v754 = vsel %vm634, %v743, %v745
      %v755 = vsel %vm634, %v745, %v747
      %v756 = vsel %vm634, %v749, %v751
      %v757 = vsel %vm634, %v751, %v753
      %762 = vst [vmem:[#allocation2 + $0x88] sm:$0xff] %v754
      %763 = vst [vmem:[#allocation2 + $0x90] sm:$0xff] %v755
      %764 = vst [vmem:[#allocation2 + $0xa8] sm:$0xff] %v756
      %765 = vst [vmem:[#allocation2 + $0xb0] sm:$0xff] %v757
      %v766 = vld [vmem:[%s6] sm:$0xf]
      %v767 = vld [vmem:[#allocation2] sm:$0xff]
      %v768 = vld [vmem:[#allocation2 + $0x8] sm:$0xff]
      %v769 = vld [vmem:[#allocation2 + $0x10] sm:$0xff]
      %v770 = vld [vmem:[#allocation2 + $0x20] sm:$0xff]
      %v771 = vld [vmem:[#allocation2 + $0x28] sm:$0xff]
      %v772 = vld [vmem:[#allocation2 + $0x30] sm:$0xff]
      %v773 = vld [vmem:[#allocation2 + $0x40] sm:$0xff]
      %v774 = vld [vmem:[#allocation2 + $0x48] sm:$0xff]
      %v775 = vld [vmem:[#allocation2 + $0x50] sm:$0xff]
      %v776 = vld [vmem:[#allocation2 + $0x60] sm:$0xff]
      %v777 = vld [vmem:[#allocation2 + $0x68] sm:$0xff]
      %v778 = vld [vmem:[#allocation2 + $0x70] sm:$0xff]
      %v779 = vld [vmem:[#allocation2 + $0x80] sm:$0xff]
      %v780 = vld [vmem:[#allocation2 + $0x88] sm:$0xff]
      %v781 = vld [vmem:[#allocation2 + $0x90] sm:$0xff]
      %v782 = vld [vmem:[#allocation2 + $0xa0] sm:$0xff]
      %v783 = vld [vmem:[#allocation2 + $0xa8] sm:$0xff]
      %v784 = vld [vmem:[#allocation2 + $0xb0] sm:$0xff]
      %s785 = scalar_lea.vmem %s6, 4
      %v786 = vld [vmem:[%s785] sm:$0xf]
      %vm787 = vcmask 785408
      %v789 = vsel %vm787, %v786, 0
      %791 = vmatprep.subr.bf16.mxu0 %v769
      %792 = vmatpush1.bf16.msra.mxu0 %v768
      %793 = vmatprep.subr.bf16.mxu0 %v772
      %794 = vmatpush1.bf16.msra.mxu0 %v771
      %795 = vmatprep.subr.bf16.mxu0 %v775
      %796 = vmatpush1.bf16.msra.mxu0 %v774
      %797 = vmatprep.subr.bf16.mxu0 %v778
      %798 = vmatpush1.bf16.msra.mxu0 %v777
      %799 = vmatprep.subr.bf16.mxu0 %v781
      %800 = vmatpush1.bf16.msra.mxu0 %v780
      %801 = vmatprep.subr.bf16.mxu0 %v784
      %802 = vmatpush1.bf16.msra.mxu0 %v783
      %803 = vmatprep.subr.bf16.mxu0 0
      %804 = vmatpush1.bf16.msra.mxu0 0
      %805 = vmatprep.subr.bf16.mxu0 0
      %806 = vmatpush1.bf16.msra.mxu0 0
      %807 = vmatprep.subr.bf16.mxu0 0
      %808 = vmatpush1.bf16.msra.mxu0 0
      %809 = vmatprep.subr.bf16.mxu0 0
      %810 = vmatpush1.bf16.msra.mxu0 0
      %811 = vmatprep.subr.bf16.mxu0 0
      %812 = vmatpush1.bf16.msra.mxu0 0
      %813 = vmatprep.subr.bf16.mxu0 0
      %814 = vmatpush1.bf16.msra.mxu0 0
      %815 = vmatprep.subr.bf16.mxu0 0
      %816 = vmatpush1.bf16.msra.mxu0 0
      %817 = vmatprep.subr.bf16.mxu0 0
      %818 = vmatpush1.bf16.msra.mxu0 0
      %819 = vmatprep.subr.bf16.mxu0 0
      %820 = vmatpush1.bf16.msra.mxu0 0
      %821 = vmatprep.subr.bf16.mxu0 0
      %822 = vmatpush1.bf16.msra.mxu0 0
      %823 = vmatprep.mubr.bf16.mxu0 0
      %824 = vmatmul.mubr.bf16.gmra.mrb[0].mxu0 %v789
      %v825 = vpop.f32.mrb[0].mxu0
      %v826 = vadd.f32 0.0, %v825
      %v827 = vpop.f32.mrb[0].mxu0
      %v828 = vadd.f32 0.0, %v827
      %v829 = vpop.f32.mrb[0].mxu0
      %v830 = vpop.f32.mrb[0].mxu0
      %831 = vdwg.mxu0
      %850 = vrot.lane.b32.xlu0 %v767, 16
      %v851 = vpop.permute.xlu0 %850
      %852 = vrot.lane.b32.xlu0 %v768, 16
      %v853 = vpop.permute.xlu0 %852
      %854 = vrot.lane.b32.xlu0 %v769, 16
      %v855 = vpop.permute.xlu0 %854
      %856 = vrot.lane.b32.xlu0 %v770, 16
      %v857 = vpop.permute.xlu0 %856
      %858 = vrot.lane.b32.xlu0 %v771, 16
      %v859 = vpop.permute.xlu0 %858
      %860 = vrot.lane.b32.xlu0 %v772, 16
      %v861 = vpop.permute.xlu0 %860
      %862 = vrot.lane.b32.xlu0 %v773, 16
      %v863 = vpop.permute.xlu0 %862
      %864 = vrot.lane.b32.xlu0 %v774, 16
      %v865 = vpop.permute.xlu0 %864
      %866 = vrot.lane.b32.xlu0 %v775, 16
      %v867 = vpop.permute.xlu0 %866
      %868 = vrot.lane.b32.xlu0 %v776, 16
      %v869 = vpop.permute.xlu0 %868
      %870 = vrot.lane.b32.xlu0 %v777, 16
      %v871 = vpop.permute.xlu0 %870
      %872 = vrot.lane.b32.xlu0 %v778, 16
      %v873 = vpop.permute.xlu0 %872
      %874 = vrot.lane.b32.xlu0 %v779, 16
      %v875 = vpop.permute.xlu0 %874
      %876 = vrot.lane.b32.xlu0 %v780, 16
      %v877 = vpop.permute.xlu0 %876
      %878 = vrot.lane.b32.xlu0 %v781, 16
      %v879 = vpop.permute.xlu0 %878
      %880 = vrot.lane.b32.xlu0 %v782, 16
      %v881 = vpop.permute.xlu0 %880
      %882 = vrot.lane.b32.xlu0 %v783, 16
      %v883 = vpop.permute.xlu0 %882
      %884 = vrot.lane.b32.xlu0 %v784, 16
      %v885 = vpop.permute.xlu0 %884
      %vm886 = vcmask 130048
      %v887 = vsel %vm886, %v851, %v853
      %v888 = vsel %vm886, %v853, %v855
      %v889 = vsel %vm886, %v857, %v859
      %v890 = vsel %vm886, %v859, %v861
      %v891 = vsel %vm886, %v863, %v865
      %v892 = vsel %vm886, %v865, %v867
      %v893 = vsel %vm886, %v869, %v871
      %v894 = vsel %vm886, %v871, %v873
      %v895 = vsel %vm886, %v875, %v877
      %v896 = vsel %vm886, %v877, %v879
      %v897 = vsel %vm886, %v881, %v883
      %v898 = vsel %vm886, %v883, %v885
      %v912 = vsel %vm787, %v766, 0
      %914 = vmatprep.subr.bf16.mxu0 %v888
      %915 = vmatpush1.bf16.msra.mxu0 %v887
      %916 = vmatprep.subr.bf16.mxu0 %v890
      %917 = vmatpush1.bf16.msra.mxu0 %v889
      %918 = vmatprep.subr.bf16.mxu0 %v892
      %919 = vmatpush1.bf16.msra.mxu0 %v891
      %920 = vmatprep.subr.bf16.mxu0 %v894
      %921 = vmatpush1.bf16.msra.mxu0 %v893
      %922 = vmatprep.subr.bf16.mxu0 %v896
      %923 = vmatpush1.bf16.msra.mxu0 %v895
      %924 = vmatprep.subr.bf16.mxu0 %v898
      %925 = vmatpush1.bf16.msra.mxu0 %v897
      %926 = vmatprep.subr.bf16.mxu0 0
      %927 = vmatpush1.bf16.msra.mxu0 0
      %928 = vmatprep.subr.bf16.mxu0 0
      %929 = vmatpush1.bf16.msra.mxu0 0
      %930 = vmatprep.subr.bf16.mxu0 0
      %931 = vmatpush1.bf16.msra.mxu0 0
      %932 = vmatprep.subr.bf16.mxu0 0
      %933 = vmatpush1.bf16.msra.mxu0 0
      %934 = vmatprep.subr.bf16.mxu0 0
      %935 = vmatpush1.bf16.msra.mxu0 0
      %936 = vmatprep.subr.bf16.mxu0 0
      %937 = vmatpush1.bf16.msra.mxu0 0
      %938 = vmatprep.subr.bf16.mxu0 0
      %939 = vmatpush1.bf16.msra.mxu0 0
      %940 = vmatprep.subr.bf16.mxu0 0
      %941 = vmatpush1.bf16.msra.mxu0 0
      %942 = vmatprep.subr.bf16.mxu0 0
      %943 = vmatpush1.bf16.msra.mxu0 0
      %944 = vmatprep.subr.bf16.mxu0 0
      %945 = vmatpush1.bf16.msra.mxu0 0
      %946 = vmatprep.mubr.bf16.mxu0 0
      %947 = vmatmul.mubr.bf16.gmra.mrb[0].mxu0 %v912
      %v948 = vpop.f32.mrb[0].mxu0
      %v949 = vadd.f32 %v826, %v948
      %v950 = vpop.f32.mrb[0].mxu0
      %v951 = vadd.f32 %v828, %v950
      %v952 = vpop.f32.mrb[0].mxu0
      %v953 = vpop.f32.mrb[0].mxu0
      %954 = vdwg.mxu0
      %s955 = scalar_lea.vmem %s6, 8
      %v956 = vld [vmem:[%s955] sm:$0xf]
      %v957 = vld [vmem:[#allocation2 + $0x8] sm:$0xff]
      %v958 = vld [vmem:[#allocation2 + $0x10] sm:$0xff]
      %v959 = vld [vmem:[#allocation2 + $0x18] sm:$0xff]
      %v960 = vld [vmem:[#allocation2 + $0x28] sm:$0xff]
      %v961 = vld [vmem:[#allocation2 + $0x30] sm:$0xff]
      %v962 = vld [vmem:[#allocation2 + $0x38] sm:$0xff]
      %v963 = vld [vmem:[#allocation2 + $0x48] sm:$0xff]
      %v964 = vld [vmem:[#allocation2 + $0x50] sm:$0xff]
      %v965 = vld [vmem:[#allocation2 + $0x58] sm:$0xff]
      %v966 = vld [vmem:[#allocation2 + $0x68] sm:$0xff]
      %v967 = vld [vmem:[#allocation2 + $0x70] sm:$0xff]
      %v968 = vld [vmem:[#allocation2 + $0x78] sm:$0xff]
      %v969 = vld [vmem:[#allocation2 + $0x88] sm:$0xff]
      %v970 = vld [vmem:[#allocation2 + $0x90] sm:$0xff]
      %v971 = vld [vmem:[#allocation2 + $0x98] sm:$0xff]
      %v972 = vld [vmem:[#allocation2 + $0xa8] sm:$0xff]
      %v973 = vld [vmem:[#allocation2 + $0xb0] sm:$0xff]
      %v974 = vld [vmem:[#allocation2 + $0xb8] sm:$0xff]
      %993 = vrot.lane.b32.xlu0 %v957, 112
      %v994 = vpop.permute.xlu0 %993
      %995 = vrot.lane.b32.xlu0 %v958, 112
      %v996 = vpop.permute.xlu0 %995
      %997 = vrot.lane.b32.xlu0 %v959, 112
      %v998 = vpop.permute.xlu0 %997
      %999 = vrot.lane.b32.xlu0 %v960, 112
      %v1000 = vpop.permute.xlu0 %999
      %1001 = vrot.lane.b32.xlu0 %v961, 112
      %v1002 = vpop.permute.xlu0 %1001
      %1003 = vrot.lane.b32.xlu0 %v962, 112
      %v1004 = vpop.permute.xlu0 %1003
      %1005 = vrot.lane.b32.xlu0 %v963, 112
      %v1006 = vpop.permute.xlu0 %1005
      %1007 = vrot.lane.b32.xlu0 %v964, 112
      %v1008 = vpop.permute.xlu0 %1007
      %1009 = vrot.lane.b32.xlu0 %v965, 112
      %v1010 = vpop.permute.xlu0 %1009
      %1011 = vrot.lane.b32.xlu0 %v966, 112
      %v1012 = vpop.permute.xlu0 %1011
      %1013 = vrot.lane.b32.xlu0 %v967, 112
      %v1014 = vpop.permute.xlu0 %1013
      %1015 = vrot.lane.b32.xlu0 %v968, 112
      %v1016 = vpop.permute.xlu0 %1015
      %1017 = vrot.lane.b32.xlu0 %v969, 112
      %v1018 = vpop.permute.xlu0 %1017
      %1019 = vrot.lane.b32.xlu0 %v970, 112
      %v1020 = vpop.permute.xlu0 %1019
      %1021 = vrot.lane.b32.xlu0 %v971, 112
      %v1022 = vpop.permute.xlu0 %1021
      %1023 = vrot.lane.b32.xlu0 %v972, 112
      %v1024 = vpop.permute.xlu0 %1023
      %1025 = vrot.lane.b32.xlu0 %v973, 112
      %v1026 = vpop.permute.xlu0 %1025
      %1027 = vrot.lane.b32.xlu0 %v974, 112
      %v1028 = vpop.permute.xlu0 %1027
      %vm1029 = vcmask 916480
      %v1030 = vsel %vm1029, %v994, %v996
      %v1031 = vsel %vm1029, %v996, %v998
      %v1032 = vsel %vm1029, %v1000, %v1002
      %v1033 = vsel %vm1029, %v1002, %v1004
      %v1034 = vsel %vm1029, %v1006, %v1008
      %v1035 = vsel %vm1029, %v1008, %v1010
      %v1036 = vsel %vm1029, %v1012, %v1014
      %v1037 = vsel %vm1029, %v1014, %v1016
      %v1038 = vsel %vm1029, %v1018, %v1020
      %v1039 = vsel %vm1029, %v1020, %v1022
      %v1040 = vsel %vm1029, %v1024, %v1026
      %v1041 = vsel %vm1029, %v1026, %v1028
      %v1055 = vsel %vm787, %v956, 0
      %1057 = vmatprep.subr.bf16.mxu0 %v1031
      %1058 = vmatpush1.bf16.msra.mxu0 %v1030
      %1059 = vmatprep.subr.bf16.mxu0 %v1033
      %1060 = vmatpush1.bf16.msra.mxu0 %v1032
      %1061 = vmatprep.subr.bf16.mxu0 %v1035
      %1062 = vmatpush1.bf16.msra.mxu0 %v1034
      %1063 = vmatprep.subr.bf16.mxu0 %v1037
      %1064 = vmatpush1.bf16.msra.mxu0 %v1036
      %1065 = vmatprep.subr.bf16.mxu0 %v1039
      %1066 = vmatpush1.bf16.msra.mxu0 %v1038
      %1067 = vmatprep.subr.bf16.mxu0 %v1041
      %1068 = vmatpush1.bf16.msra.mxu0 %v1040
      %1069 = vmatprep.subr.bf16.mxu0 0
      %1070 = vmatpush1.bf16.msra.mxu0 0
      %1071 = vmatprep.subr.bf16.mxu0 0
      %1072 = vmatpush1.bf16.msra.mxu0 0
      %1073 = vmatprep.subr.bf16.mxu0 0
      %1074 = vmatpush1.bf16.msra.mxu0 0
      %1075 = vmatprep.subr.bf16.mxu0 0
      %1076 = vmatpush1.bf16.msra.mxu0 0
      %1077 = vmatprep.subr.bf16.mxu0 0
      %1078 = vmatpush1.bf16.msra.mxu0 0
      %1079 = vmatprep.subr.bf16.mxu0 0
      %1080 = vmatpush1.bf16.msra.mxu0 0
      %1081 = vmatprep.subr.bf16.mxu0 0
      %1082 = vmatpush1.bf16.msra.mxu0 0
      %1083 = vmatprep.subr.bf16.mxu0 0
      %1084 = vmatpush1.bf16.msra.mxu0 0
      %1085 = vmatprep.subr.bf16.mxu0 0
      %1086 = vmatpush1.bf16.msra.mxu0 0
      %1087 = vmatprep.subr.bf16.mxu0 0
      %1088 = vmatpush1.bf16.msra.mxu0 0
      %1089 = vmatprep.mubr.bf16.mxu0 0
      %1090 = vmatmul.mubr.bf16.gmra.mrb[0].mxu0 %v1055
      %v1091 = vpop.f32.mrb[0].mxu0
      %v1092 = vadd.f32 0.0, %v1091
      %v1093 = vpop.f32.mrb[0].mxu0
      %v1094 = vadd.f32 0.0, %v1093
      %v1095 = vpop.f32.mrb[0].mxu0
      %v1096 = vpop.f32.mrb[0].mxu0
      %1097 = vdwg.mxu0
      %v1098 = vadd.f32 %v949, %v1092
      %v1099 = vadd.f32 %v951, %v1094
      %1100 = vst [vmem:[%s332] sm:$0xff] %v1098
      %1101 = vst [vmem:[%s332 + $0x8] sm:$0xff] %v1099
      %v1102 = vld [vmem:[%s327] sm:$0xff]
      %v1103 = vld [vmem:[%s327 + $0x8] sm:$0xff]
      %v1104 = vld [vmem:[%s327 + $0x10] sm:$0xff]
      %v1105 = vld [vmem:[%s327 + $0x18] sm:$0xff]
      %v1106 = vld [vmem:[%s327 + $0x20] sm:$0xff]
      %v1107 = vld [vmem:[%s327 + $0x28] sm:$0xff]
      %v1108 = vld [vmem:[%s327 + $0x30] sm:$0xff]
      %v1109 = vld [vmem:[%s327 + $0x38] sm:$0xff]
      %1110 = vst [vmem:[%s332 + $0x10] sm:$0xff] %v1102
      %1111 = vst [vmem:[%s332 + $0x18] sm:$0xff] %v1103
      %1112 = vst [vmem:[%s332 + $0x20] sm:$0xff] %v1104
      %1113 = vst [vmem:[%s332 + $0x28] sm:$0xff] %v1105
      %1114 = vst [vmem:[%s332 + $0x30] sm:$0xff] %v1106
      %1115 = vst [vmem:[%s332 + $0x38] sm:$0xff] %v1107
      %1116 = vst [vmem:[%s332 + $0x40] sm:$0xff] %v1108
      %1117 = vst [vmem:[%s332 + $0x48] sm:$0xff] %v1109
      %p1118 = scmp.lt.s32.totalorder %s20, 1
      %s1119 = scalar_select %p1118, %s20, 1
      %s1120 = smul.addr %s1119, 10
      %s1121 = smul.addr %s1120, 8
      %s1122 = scalar_lea.vmem %s9, %s1121
      // Predicated region
      $region57: #{bottleneck_forward.1} parent=55 // pred_check
        %p1123 = pneg %p232
      $region58: #{bottleneck_forward.1} parent=55 // pred_check_branch
        %1125 = sbr.rel (%p1123) target = $region60
      $region59: #{bottleneck_forward.1} parent=55 // pred_region
        _
      $region60: #{bottleneck_forward.1} parent=55 // pred_fallthru
        _
    $region56: #{bottleneck_forward.1} parent=5 // pred_fallthru
      _
    %p1126 = scmp.le.s32.totalorder 2, %s15
    // Predicated region
    $region61: #{bottleneck_forward.1} parent=5 // pred_check
      %p1127 = pneg %p1126
    $region62: #{bottleneck_forward.1} parent=5 // pred_check_branch
      %1129 = sbr.rel (%p1127) target = $region64
    $region63: #{bottleneck_forward.1} parent=5 // pred_region
      %s1130 = ssub.s32 %s15, 2
      // Predicated region
      $region65: #{bottleneck_forward.1} parent=63 // pred_check
        %p1131 = pneg %p238
      $region66: #{bottleneck_forward.1} parent=63 // pred_check_branch
        %1133 = sbr.rel (%p1131) target = $region68
      $region67: #{bottleneck_forward.1} parent=63 // pred_region
        %p1134 = scmp.lt.s32.totalorder %s21, 1
        %s1135 = scalar_select %p1134, %s21, 1
        %s1136 = smul.addr %s1135, 10
        %s1137 = smul.addr %s1136, 8
        %s1138 = scalar_lea.vmem %s9, %s1137
      $region68: #{bottleneck_forward.1} parent=63 // pred_fallthru
        _
    $region64: #{bottleneck_forward.1} parent=5 // pred_fallthru
      _
  $region6: #{bottleneck_forward.1} parent=0 // loop_footer
    %s19 = sadd.s32 1, %s15
  $region7: #{bottleneck_forward.1} parent=0 // loop_footer_branch
    %14 = sbr.rel target = $region3
  $region8: #{bottleneck_forward.1} parent=0 // loop_exit
    _

</llo_original>
